<compile_context>
chip_gen: v5e
topology: v5e:2x2
jax: 0.10.0
libtpu: 0.0.40
codegen_flags: <defaults>
</compile_context>

<pallas_src>
import jax
import jax.numpy as jnp
from jax.experimental import pallas as pl
from jax.experimental.pallas import tpu as pltpu

D_IN = 784
D_IN_PAD = 896      # 7 * 128, lane-aligned K for fc1
H1 = 256
H2 = 64
D_OUT = 10
D_OUT_PAD = 128     # lane-dense output slab


def _mlp_kernel(x_ref, w1_ref, b1_ref, w2_ref, b2_ref, w3_ref, b3_ref, o_ref):
    # bf16 operands feed the MXU at full rate; accumulation stays f32.
    x = x_ref[...].astype(jnp.bfloat16)                                   # (TB, 896)

    h1 = jnp.dot(x, w1_ref[...], preferred_element_type=jnp.float32)      # (TB, 256) f32
    h1 = jnp.maximum(h1 + b1_ref[...], 0.0)

    h2 = jnp.dot(h1.astype(jnp.bfloat16), w2_ref[...],
                 preferred_element_type=jnp.float32)                       # (TB, 64) f32
    h2 = jnp.maximum(h2 + b2_ref[...], 0.0)

    out = jnp.dot(h2.astype(jnp.bfloat16), w3_ref[...],
                  preferred_element_type=jnp.float32)                      # (TB, 128) f32
    o_ref[...] = out + b3_ref[...]


def init_params(key):
    """Deterministic init mimicking PyTorch nn.Linear default (U[-1/sqrt(fan_in), +])."""
    def linear(key, fan_in, fan_out):
        kw, kb = jax.random.split(key)
        bound = 1.0 / jnp.sqrt(float(fan_in))
        w = jax.random.uniform(kw, (fan_in, fan_out), jnp.float32, -bound, bound)
        bias = jax.random.uniform(kb, (1, fan_out), jnp.float32, -bound, bound)
        return w, bias

    k1, k2, k3 = jax.random.split(key, 3)
    w1, b1 = linear(k1, D_IN, H1)
    w2, b2 = linear(k2, H1, H2)
    w3, b3 = linear(k3, H2, D_OUT)
    return {"w1": w1, "b1": b1, "w2": w2, "b2": b2, "w3": w3, "b3": b3}


def prepare_params(params):
    """Pad + cast once: bf16 weights, lane-padded fc1 rows and fc3 columns."""
    w1 = jnp.zeros((D_IN_PAD, H1), jnp.bfloat16)
    w1 = w1.at[:D_IN, :].set(params["w1"].astype(jnp.bfloat16))
    w2 = params["w2"].astype(jnp.bfloat16)
    w3 = jnp.zeros((H2, D_OUT_PAD), jnp.bfloat16)
    w3 = w3.at[:, :D_OUT].set(params["w3"].astype(jnp.bfloat16))

    b1 = params["b1"].astype(jnp.float32).reshape(1, H1)
    b2 = params["b2"].astype(jnp.float32).reshape(1, H2)
    b3 = jnp.zeros((1, D_OUT_PAD), jnp.float32)
    b3 = b3.at[:, :D_OUT].set(params["b3"].astype(jnp.float32).reshape(1, D_OUT))
    return {"w1": w1, "b1": b1, "w2": w2, "b2": b2, "w3": w3, "b3": b3}


def net2_forward(x_nchw, prepared, *, tile_b=512):
    """Forward pass of Net2.

    Args:
      x_nchw: (B, 1, 28, 28) float32 (NCHW, MNIST-style).
      prepared: output of prepare_params().
      tile_b: batch tile for the gridded (streaming) path.
    Returns:
      (B, 10) float32 logits.
    """
    b = x_nchw.shape[0]
    x = x_nchw.reshape(b, -1).astype(jnp.float32)              # flatten(x, 1) -> (B, 784)
    x = jnp.pad(x, ((0, 0), (0, D_IN_PAD - D_IN)))             # lane-align K: 784 -> 896

    args = (x, prepared["w1"], prepared["b1"], prepared["w2"], prepared["b2"],
            prepared["w3"], prepared["b3"])

    if b <= tile_b:
        # Tiny batch: single fused whole-block call (latency floor, no grid).
        vmem = pl.BlockSpec(memory_space=pltpu.MemorySpace.VMEM)
        out = pl.pallas_call(
            _mlp_kernel,
            out_shape=jax.ShapeDtypeStruct((b, D_OUT_PAD), jnp.float32),
            in_specs=[vmem] * 7,
            out_specs=vmem,
        )(*args)
        return out[:, :D_OUT]

    # Streaming path: 1-D grid over the batch.  Input/output tiles for step i+1
    # prefetch while step i computes; weights/biases have constant index_maps so
    # they are DMA'd once and stay resident in VMEM across grid steps.
    b_pad = pl.cdiv(b, tile_b) * tile_b
    if b_pad != b:
        x = jnp.pad(x, ((0, b_pad - b), (0, 0)))
        args = (x,) + args[1:]

    const = lambda i: (0, 0)
    out = pl.pallas_call(
        _mlp_kernel,
        out_shape=jax.ShapeDtypeStruct((b_pad, D_OUT_PAD), jnp.float32),
        grid=(b_pad // tile_b,),
        in_specs=[
            pl.BlockSpec((tile_b, D_IN_PAD), lambda i: (i, 0)),   # streamed x tile
            pl.BlockSpec((D_IN_PAD, H1), const),                  # resident weights
            pl.BlockSpec((1, H1), const),
            pl.BlockSpec((H1, H2), const),
            pl.BlockSpec((1, H2), const),
            pl.BlockSpec((H2, D_OUT_PAD), const),
            pl.BlockSpec((1, D_OUT_PAD), const),
        ],
        out_specs=pl.BlockSpec((tile_b, D_OUT_PAD), lambda i: (i, 0)),
        compiler_params=pltpu.CompilerParams(
            dimension_semantics=("parallel",),       # shard batch axis across TCs (v7x)
            vmem_limit_bytes=32 * 1024 * 1024,       # headroom; safe on all generations
        ),
    )(*args)
    return out[:b, :D_OUT]


def net2_reference(x_nchw, prepared):
    """Plain-JAX reference mirroring the kernel's bf16-weight / f32-accumulate math."""
    b = x_nchw.shape[0]
    x = x_nchw.reshape(b, -1).astype(jnp.float32)
    x = jnp.pad(x, ((0, 0), (0, D_IN_PAD - D_IN)))
    h1 = jnp.maximum(
        jnp.dot(x.astype(jnp.bfloat16), prepared["w1"],
                preferred_element_type=jnp.float32) + prepared["b1"], 0.0)
    h2 = jnp.maximum(
        jnp.dot(h1.astype(jnp.bfloat16), prepared["w2"],
                preferred_element_type=jnp.float32) + prepared["b2"], 0.0)
    out = jnp.dot(h2.astype(jnp.bfloat16), prepared["w3"],
                  preferred_element_type=jnp.float32) + prepared["b3"]
    return out[:, :D_OUT]


if __name__ == "__main__":
    key = jax.random.PRNGKey(0)
    k_params, k_x1, k_x2 = jax.random.split(key, 3)

    params = init_params(k_params)
    prepared = prepare_params(params)

    # 1) Tiny batch -> single whole-block fused call.
    x_small = jax.random.normal(k_x1, (8, 1, 28, 28), jnp.float32)
    y_small = net2_forward(x_small, prepared)
    jax.block_until_ready(y_small)
    assert y_small.shape == (8, 10)
    assert jnp.allclose(y_small, net2_reference(x_small, prepared), atol=2e-3, rtol=2e-3)

    # 2) Larger batch -> gridded streaming path (here: 200 rows, tile_b=128 -> 2 grid steps,
    #    batch zero-padded to 256 and sliced back).
    x_big = jax.random.normal(k_x2, (200, 1, 28, 28), jnp.float32)
    y_big = net2_forward(x_big, prepared, tile_b=128)
    jax.block_until_ready(y_big)
    assert y_big.shape == (200, 10)
    assert jnp.allclose(y_big, net2_reference(x_big, prepared), atol=2e-3, rtol=2e-3)

    print("KERNEL_OK")
</pallas_src>

<mosaic_0001>
module attributes {stable_mosaic.version = 11 : i64} {
  func.func @_mlp_kernel(%arg0: memref<8x896xf32, #tpu.memory_space<vmem>>, %arg1: memref<896x256xbf16, #tpu.memory_space<vmem>>, %arg2: memref<1x256xf32, #tpu.memory_space<vmem>>, %arg3: memref<256x64xbf16, #tpu.memory_space<vmem>>, %arg4: memref<1x64xf32, #tpu.memory_space<vmem>>, %arg5: memref<64x128xbf16, #tpu.memory_space<vmem>>, %arg6: memref<1x128xf32, #tpu.memory_space<vmem>>, %arg7: memref<8x128xf32, #tpu.memory_space<vmem>>) attributes {dimension_semantics = [], scalar_prefetch = 0 : i64, scratch_operands = 0 : i64, tpu.core_type = #tpu.core_type<tc>} {
    %c0 = arith.constant 0 : index
    %c0_0 = arith.constant 0 : index
    %0 = vector.load %arg0[%c0, %c0_0] : memref<8x896xf32, #tpu.memory_space<vmem>>, vector<8x896xf32>
    %1 = arith.truncf %0 : vector<8x896xf32> to vector<8x896xbf16>
    %c0_1 = arith.constant 0 : index
    %c0_2 = arith.constant 0 : index
    %2 = vector.load %arg1[%c0_1, %c0_2] : memref<896x256xbf16, #tpu.memory_space<vmem>>, vector<896x256xbf16>
    %cst = arith.constant dense<0.000000e+00> : vector<8x256xf32>
    %3 = tpu.matmul %1, %2, %cst {dimension_numbers = #tpu.dot_dimension_numbers<[1], [0], [0], [1], [0, 0, 1, 1], [], []>} : vector<8x896xbf16>, vector<896x256xbf16>, vector<8x256xf32> -> vector<8x256xf32>
    %c0_3 = arith.constant 0 : index
    %c0_4 = arith.constant 0 : index
    %4 = vector.load %arg2[%c0_3, %c0_4] : memref<1x256xf32, #tpu.memory_space<vmem>>, vector<1x256xf32>
    %5 = vector.broadcast %4 : vector<1x256xf32> to vector<8x256xf32>
    %6 = arith.addf %3, %5 : vector<8x256xf32>
    %cst_5 = arith.constant 0.000000e+00 : f32
    %7 = vector.broadcast %cst_5 : f32 to vector<8x256xf32>
    %8 = arith.maximumf %6, %7 : vector<8x256xf32>
    %9 = arith.truncf %8 : vector<8x256xf32> to vector<8x256xbf16>
    %c0_6 = arith.constant 0 : index
    %c0_7 = arith.constant 0 : index
    %10 = vector.load %arg3[%c0_6, %c0_7] : memref<256x64xbf16, #tpu.memory_space<vmem>>, vector<256x64xbf16>
    %cst_8 = arith.constant dense<0.000000e+00> : vector<8x64xf32>
    %11 = tpu.matmul %9, %10, %cst_8 {dimension_numbers = #tpu.dot_dimension_numbers<[1], [0], [0], [1], [0, 0, 1, 1], [], []>} : vector<8x256xbf16>, vector<256x64xbf16>, vector<8x64xf32> -> vector<8x64xf32>
    %c0_9 = arith.constant 0 : index
    %c0_10 = arith.constant 0 : index
    %12 = vector.load %arg4[%c0_9, %c0_10] : memref<1x64xf32, #tpu.memory_space<vmem>>, vector<1x64xf32>
    %13 = vector.broadcast %12 : vector<1x64xf32> to vector<8x64xf32>
    %14 = arith.addf %11, %13 : vector<8x64xf32>
    %cst_11 = arith.constant 0.000000e+00 : f32
    %15 = vector.broadcast %cst_11 : f32 to vector<8x64xf32>
    %16 = arith.maximumf %14, %15 : vector<8x64xf32>
    %17 = arith.truncf %16 : vector<8x64xf32> to vector<8x64xbf16>
    %c0_12 = arith.constant 0 : index
    %c0_13 = arith.constant 0 : index
    %18 = vector.load %arg5[%c0_12, %c0_13] : memref<64x128xbf16, #tpu.memory_space<vmem>>, vector<64x128xbf16>
    %cst_14 = arith.constant dense<0.000000e+00> : vector<8x128xf32>
    %19 = tpu.matmul %17, %18, %cst_14 {dimension_numbers = #tpu.dot_dimension_numbers<[1], [0], [0], [1], [0, 0, 1, 1], [], []>} : vector<8x64xbf16>, vector<64x128xbf16>, vector<8x128xf32> -> vector<8x128xf32>
    %c0_15 = arith.constant 0 : index
    %c0_16 = arith.constant 0 : index
    %20 = vector.load %arg6[%c0_15, %c0_16] : memref<1x128xf32, #tpu.memory_space<vmem>>, vector<1x128xf32>
    %21 = vector.broadcast %20 : vector<1x128xf32> to vector<8x128xf32>
    %22 = arith.addf %19, %21 : vector<8x128xf32>
    %c0_17 = arith.constant 0 : index
    %c0_18 = arith.constant 0 : index
    %23 = vector.load %arg7[%c0_17, %c0_18] : memref<8x128xf32, #tpu.memory_space<vmem>>, vector<8x128xf32>
    tpu.vector_store %arg7[%c0_17, %c0_18], %22 {strides = array<i32>} : memref<8x128xf32, #tpu.memory_space<vmem>>, vector<8x128xf32>,
    return
  }
}

</mosaic_0001>

<llo_original>
// kernel: tpu_custom_call.1
$region0: #{tpu_custom_call.1}
  #allocation0 [shape = 'u32[]', space=smem, size = 0x4, offset = 0x4, fixed_abs, tag = 'smem constant byte address 0x4 - core index']
  #allocation1 [shape = 'u32[72,128]{1,0:T(1,128)}', space=vmem, size = 0x9000, scoped, tag = 'internal scratch']
  %s0 = inlined_call_operand.vmem [shape: f32[8,896], index: 0, kind: input, shape index: {}]
  %s1 = inlined_call_operand.hbm [shape: bf16[896,256], index: 1, kind: input, shape index: {}]
  %s2 = inlined_call_operand.vmem [shape: f32[1,256], index: 2, kind: input, shape index: {}]
  %s3 = inlined_call_operand.vmem [shape: bf16[256,64], index: 3, kind: input, shape index: {}]
  %s4 = inlined_call_operand.vmem [shape: f32[1,64], index: 4, kind: input, shape index: {}]
  %s5 = inlined_call_operand.vmem [shape: bf16[64,128], index: 5, kind: input, shape index: {}]
  %s6 = inlined_call_operand.vmem [shape: f32[1,128], index: 6, kind: input, shape index: {}]
  %s7 = inlined_call_operand.hbm [shape: f32[8,128], index: 7, kind: output, shape index: {}]
  %s8 = sld [smem:[#allocation0]]
  $region42: #{tpu_custom_call.1} parent=0
    _
  %s10 = ssub.s32 1, %s8
  %s11 = scalar_select 0, %s10, %s8
  $region1: #{tpu_custom_call.1} parent=0
    #allocation2 [shape = 'u8[458752]{0}', space=vmem, size = 0x70000, scoped, tag = 'input window, operand 1, single buffered']
    #allocation3 [shape = 's32[1]{0}', space=sflag, size = 0x4, scoped, tag = 'scoped memory for tpu_custom_call.1']
    #allocation4 [shape = 's32[1]{0}', space=sflag, size = 0x4, scoped, tag = 'scoped memory for tpu_custom_call.1']
    #allocation5 [shape = 'u8[4096]{0}', space=vmem, size = 0x1000, scoped, tag = 'output window, operand 0, single buffered']
    %12 = vsyncpa [#allocation3], 0
    %13 = vsyncpa [#allocation4], 0
    // Predicated region
    $region2: #{tpu_custom_call.1} parent=1 // pred_check
      _
    $region3: #{tpu_custom_call.1} parent=1 // pred_check_branch
      %15 = sbr.rel (0) target = $region5
    $region4: #{tpu_custom_call.1} parent=1 // pred_region
      _
    $region5: #{tpu_custom_call.1} parent=1 // pred_fallthru
      _
    // Predicated region
    $region6: #{tpu_custom_call.1} parent=1 // pred_check
      _
    $region7: #{tpu_custom_call.1} parent=1 // pred_check_branch
      %17 = sbr.rel (0) target = $region9
    $region8: #{tpu_custom_call.1} parent=1 // pred_region
      %19 = vsyncadd [#allocation3], 0
      %s20 = sshll.u32 %s1, 4
      %s21 = int_to_ptr.hbm [resolvable:$true] %s20
      %s22 = sshll.u32 [#allocation2], 4
      %s23 = int_to_ptr.vmem [resolvable:$true] %s22
      %28 = dma.hbm_to_vmem [thread:$0]  %s21, 14336, %s23, [#allocation3], 128, 128, 8
    $region9: #{tpu_custom_call.1} parent=1 // pred_fallthru
      _
    // Predicated region
    $region10: #{tpu_custom_call.1} parent=1 // pred_check
      _
    $region11: #{tpu_custom_call.1} parent=1 // pred_check_branch
      %30 = sbr.rel (0) target = $region13
    $region12: #{tpu_custom_call.1} parent=1 // pred_region
      _
    $region13: #{tpu_custom_call.1} parent=1 // pred_fallthru
      _
    // Predicated region
    $region14: #{tpu_custom_call.1} parent=1 // pred_check
      _
    $region15: #{tpu_custom_call.1} parent=1 // pred_check_branch
      %32 = sbr.rel (0) target = $region17
    $region16: #{tpu_custom_call.1} parent=1 // pred_region
      _
    $region17: #{tpu_custom_call.1} parent=1 // pred_fallthru
      _
    // Predicated region
    $region18: #{tpu_custom_call.1} parent=1 // pred_check
      _
    $region19: #{tpu_custom_call.1} parent=1 // pred_check_branch
      %34 = sbr.rel (0) target = $region21
    $region20: #{tpu_custom_call.1} parent=1 // pred_region
      _
    $region21: #{tpu_custom_call.1} parent=1 // pred_fallthru
      _
    // Predicated region
    $region22: #{tpu_custom_call.1} parent=1 // pred_check
      _
    $region23: #{tpu_custom_call.1} parent=1 // pred_check_branch
      %36 = sbr.rel (0) target = $region25
    $region24: #{tpu_custom_call.1} parent=1 // pred_region
      _
    $region25: #{tpu_custom_call.1} parent=1 // pred_fallthru
      _
    // Predicated region
    $region26: #{tpu_custom_call.1} parent=1 // pred_check
      _
    $region27: #{tpu_custom_call.1} parent=1 // pred_check_branch
      %38 = sbr.rel (0) target = $region29
    $region28: #{tpu_custom_call.1} parent=1 // pred_region
      _
    $region29: #{tpu_custom_call.1} parent=1 // pred_fallthru
      _
    // Predicated region
    $region30: #{tpu_custom_call.1} parent=1 // pred_check
      _
    $region31: #{tpu_custom_call.1} parent=1 // pred_check_branch
      %40 = sbr.rel (0) target = $region33
    $region32: #{tpu_custom_call.1} parent=1 // pred_region
      %42 = dma.done [#allocation3], 14336
    $region33: #{tpu_custom_call.1} parent=1 // pred_fallthru
      _
    %v44 = vld [vmem:[%s0] sm:$0xff]
    %v45 = vld [vmem:[%s0 + $0x8] sm:$0xff]
    %v46 = vld [vmem:[%s0 + $0x10] sm:$0xff]
    %v47 = vld [vmem:[%s0 + $0x18] sm:$0xff]
    %v48 = vld [vmem:[%s0 + $0x20] sm:$0xff]
    %v49 = vld [vmem:[%s0 + $0x28] sm:$0xff]
    %v50 = vld [vmem:[%s0 + $0x30] sm:$0xff]
    %v51 = vpack.c.bf16 %v44, %v44
    %v52 = vpack.c.bf16 %v45, %v45
    %v53 = vpack.c.bf16 %v46, %v46
    %v54 = vpack.c.bf16 %v47, %v47
    %v55 = vpack.c.bf16 %v48, %v48
    %v56 = vpack.c.bf16 %v49, %v49
    %v57 = vpack.c.bf16 %v50, %v50
    %v58 = vld [vmem:[#allocation2] sm:$0xff]
    %v59 = vld [vmem:[#allocation2 + $0x8] sm:$0xff]
    %v60 = vld [vmem:[#allocation2 + $0x10] sm:$0xff]
    %v61 = vld [vmem:[#allocation2 + $0x18] sm:$0xff]
    %v62 = vld [vmem:[#allocation2 + $0x20] sm:$0xff]
    %v63 = vld [vmem:[#allocation2 + $0x28] sm:$0xff]
    %v64 = vld [vmem:[#allocation2 + $0x30] sm:$0xff]
    %v65 = vld [vmem:[#allocation2 + $0x38] sm:$0xff]
    %v66 = vld [vmem:[#allocation2 + $0x40] sm:$0xff]
    %v67 = vld [vmem:[#allocation2 + $0x48] sm:$0xff]
    %v68 = vld [vmem:[#allocation2 + $0x50] sm:$0xff]
    %v69 = vld [vmem:[#allocation2 + $0x58] sm:$0xff]
    %v70 = vld [vmem:[#allocation2 + $0x60] sm:$0xff]
    %v71 = vld [vmem:[#allocation2 + $0x68] sm:$0xff]
    %v72 = vld [vmem:[#allocation2 + $0x70] sm:$0xff]
    %v73 = vld [vmem:[#allocation2 + $0x78] sm:$0xff]
    %v74 = vld [vmem:[#allocation2 + $0x80] sm:$0xff]
    %v75 = vld [vmem:[#allocation2 + $0x88] sm:$0xff]
    %v76 = vld [vmem:[#allocation2 + $0x90] sm:$0xff]
    %v77 = vld [vmem:[#allocation2 + $0x98] sm:$0xff]
    %v78 = vld [vmem:[#allocation2 + $0xa0] sm:$0xff]
    %v79 = vld [vmem:[#allocation2 + $0xa8] sm:$0xff]
    %v80 = vld [vmem:[#allocation2 + $0xb0] sm:$0xff]
    %v81 = vld [vmem:[#allocation2 + $0xb8] sm:$0xff]
    %v82 = vld [vmem:[#allocation2 + $0xc0] sm:$0xff]
    %v83 = vld [vmem:[#allocation2 + $0xc8] sm:$0xff]
    %v84 = vld [vmem:[#allocation2 + $0xd0] sm:$0xff]
    %v85 = vld [vmem:[#allocation2 + $0xd8] sm:$0xff]
    %v86 = vld [vmem:[#allocation2 + $0xe0] sm:$0xff]
    %v87 = vld [vmem:[#allocation2 + $0xe8] sm:$0xff]
    %v88 = vld [vmem:[#allocation2 + $0xf0] sm:$0xff]
    %v89 = vld [vmem:[#allocation2 + $0xf8] sm:$0xff]
    %v90 = vld [vmem:[#allocation2 + $0x100] sm:$0xff]
    %v91 = vld [vmem:[#allocation2 + $0x108] sm:$0xff]
    %v92 = vld [vmem:[#allocation2 + $0x110] sm:$0xff]
    %v93 = vld [vmem:[#allocation2 + $0x118] sm:$0xff]
    %v94 = vld [vmem:[#allocation2 + $0x120] sm:$0xff]
    %v95 = vld [vmem:[#allocation2 + $0x128] sm:$0xff]
    %v96 = vld [vmem:[#allocation2 + $0x130] sm:$0xff]
    %v97 = vld [vmem:[#allocation2 + $0x138] sm:$0xff]
    %v98 = vld [vmem:[#allocation2 + $0x140] sm:$0xff]
    %v99 = vld [vmem:[#allocation2 + $0x148] sm:$0xff]
    %v100 = vld [vmem:[#allocation2 + $0x150] sm:$0xff]
    %v101 = vld [vmem:[#allocation2 + $0x158] sm:$0xff]
    %v102 = vld [vmem:[#allocation2 + $0x160] sm:$0xff]
    %v103 = vld [vmem:[#allocation2 + $0x168] sm:$0xff]
    %v104 = vld [vmem:[#allocation2 + $0x170] sm:$0xff]
    %v105 = vld [vmem:[#allocation2 + $0x178] sm:$0xff]
    %v106 = vld [vmem:[#allocation2 + $0x180] sm:$0xff]
    %v107 = vld [vmem:[#allocation2 + $0x188] sm:$0xff]
    %v108 = vld [vmem:[#allocation2 + $0x190] sm:$0xff]
    %v109 = vld [vmem:[#allocation2 + $0x198] sm:$0xff]
    %v110 = vld [vmem:[#allocation2 + $0x1a0] sm:$0xff]
    %v111 = vld [vmem:[#allocation2 + $0x1a8] sm:$0xff]
    %v112 = vld [vmem:[#allocation2 + $0x1b0] sm:$0xff]
    %v113 = vld [vmem:[#allocation2 + $0x1b8] sm:$0xff]
    %v114 = vld [vmem:[#allocation2 + $0x1c0] sm:$0xff]
    %v115 = vld [vmem:[#allocation2 + $0x1c8] sm:$0xff]
    %v116 = vld [vmem:[#allocation2 + $0x1d0] sm:$0xff]
    %v117 = vld [vmem:[#allocation2 + $0x1d8] sm:$0xff]
    %v118 = vld [vmem:[#allocation2 + $0x1e0] sm:$0xff]
    %v119 = vld [vmem:[#allocation2 + $0x1e8] sm:$0xff]
    %v120 = vld [vmem:[#allocation2 + $0x1f0] sm:$0xff]
    %v121 = vld [vmem:[#allocation2 + $0x1f8] sm:$0xff]
    %v122 = vld [vmem:[#allocation2 + $0x200] sm:$0xff]
    %v123 = vld [vmem:[#allocation2 + $0x208] sm:$0xff]
    %v124 = vld [vmem:[#allocation2 + $0x210] sm:$0xff]
    %v125 = vld [vmem:[#allocation2 + $0x218] sm:$0xff]
    %v126 = vld [vmem:[#allocation2 + $0x220] sm:$0xff]
    %v127 = vld [vmem:[#allocation2 + $0x228] sm:$0xff]
    %v128 = vld [vmem:[#allocation2 + $0x230] sm:$0xff]
    %v129 = vld [vmem:[#allocation2 + $0x238] sm:$0xff]
    %v130 = vld [vmem:[#allocation2 + $0x240] sm:$0xff]
    %v131 = vld [vmem:[#allocation2 + $0x248] sm:$0xff]
    %v132 = vld [vmem:[#allocation2 + $0x250] sm:$0xff]
    %v133 = vld [vmem:[#allocation2 + $0x258] sm:$0xff]
    %v134 = vld [vmem:[#allocation2 + $0x260] sm:$0xff]
    %v135 = vld [vmem:[#allocation2 + $0x268] sm:$0xff]
    %v136 = vld [vmem:[#allocation2 + $0x270] sm:$0xff]
    %v137 = vld [vmem:[#allocation2 + $0x278] sm:$0xff]
    %v138 = vld [vmem:[#allocation2 + $0x280] sm:$0xff]
    %v139 = vld [vmem:[#allocation2 + $0x288] sm:$0xff]
    %v140 = vld [vmem:[#allocation2 + $0x290] sm:$0xff]
    %v141 = vld [vmem:[#allocation2 + $0x298] sm:$0xff]
    %v142 = vld [vmem:[#allocation2 + $0x2a0] sm:$0xff]
    %v143 = vld [vmem:[#allocation2 + $0x2a8] sm:$0xff]
    %v144 = vld [vmem:[#allocation2 + $0x2b0] sm:$0xff]
    %v145 = vld [vmem:[#allocation2 + $0x2b8] sm:$0xff]
    %v146 = vld [vmem:[#allocation2 + $0x2c0] sm:$0xff]
    %v147 = vld [vmem:[#allocation2 + $0x2c8] sm:$0xff]
    %v148 = vld [vmem:[#allocation2 + $0x2d0] sm:$0xff]
    %v149 = vld [vmem:[#allocation2 + $0x2d8] sm:$0xff]
    %v150 = vld [vmem:[#allocation2 + $0x2e0] sm:$0xff]
    %v151 = vld [vmem:[#allocation2 + $0x2e8] sm:$0xff]
    %v152 = vld [vmem:[#allocation2 + $0x2f0] sm:$0xff]
    %v153 = vld [vmem:[#allocation2 + $0x2f8] sm:$0xff]
    %v154 = vld [vmem:[#allocation2 + $0x300] sm:$0xff]
    %v155 = vld [vmem:[#allocation2 + $0x308] sm:$0xff]
    %v156 = vld [vmem:[#allocation2 + $0x310] sm:$0xff]
    %v157 = vld [vmem:[#allocation2 + $0x318] sm:$0xff]
    %v158 = vld [vmem:[#allocation2 + $0x320] sm:$0xff]
    %v159 = vld [vmem:[#allocation2 + $0x328] sm:$0xff]
    %v160 = vld [vmem:[#allocation2 + $0x330] sm:$0xff]
    %v161 = vld [vmem:[#allocation2 + $0x338] sm:$0xff]
    %v162 = vld [vmem:[#allocation2 + $0x340] sm:$0xff]
    %v163 = vld [vmem:[#allocation2 + $0x348] sm:$0xff]
    %v164 = vld [vmem:[#allocation2 + $0x350] sm:$0xff]
    %v165 = vld [vmem:[#allocation2 + $0x358] sm:$0xff]
    %v166 = vld [vmem:[#allocation2 + $0x360] sm:$0xff]
    %v167 = vld [vmem:[#allocation2 + $0x368] sm:$0xff]
    %v168 = vld [vmem:[#allocation2 + $0x370] sm:$0xff]
    %v169 = vld [vmem:[#allocation2 + $0x378] sm:$0xff]
    %v170 = vld [vmem:[%s2] sm:$0x3]
    %v172 = vperm.slane %v170, 0
    %v173 = vperm.slane %v170, 1
    %v288 = vunpack.c.l.b16 %v58
    %v289 = vunpack.c.h.b16 %v58
    %v290 = vunpack.c.l.b16 %v59
    %v291 = vunpack.c.h.b16 %v59
    %v292 = vunpack.c.l.b16 %v60
    %v293 = vunpack.c.h.b16 %v60
    %v294 = vunpack.c.l.b16 %v61
    %v295 = vunpack.c.h.b16 %v61
    %v296 = vunpack.c.l.b16 %v62
    %v297 = vunpack.c.h.b16 %v62
    %v298 = vunpack.c.l.b16 %v63
    %v299 = vunpack.c.h.b16 %v63
    %v300 = vunpack.c.l.b16 %v64
    %v301 = vunpack.c.h.b16 %v64
    %v302 = vunpack.c.l.b16 %v65
    %v303 = vunpack.c.h.b16 %v65
    %v304 = vunpack.c.l.b16 %v66
    %v305 = vunpack.c.h.b16 %v66
    %v306 = vunpack.c.l.b16 %v67
    %v307 = vunpack.c.h.b16 %v67
    %v308 = vunpack.c.l.b16 %v68
    %v309 = vunpack.c.h.b16 %v68
    %v310 = vunpack.c.l.b16 %v69
    %v311 = vunpack.c.h.b16 %v69
    %v312 = vunpack.c.l.b16 %v70
    %v313 = vunpack.c.h.b16 %v70
    %v314 = vunpack.c.l.b16 %v71
    %v315 = vunpack.c.h.b16 %v71
    %v316 = vunpack.c.l.b16 %v72
    %v317 = vunpack.c.h.b16 %v72
    %v318 = vunpack.c.l.b16 %v73
    %v319 = vunpack.c.h.b16 %v73
    %v320 = vunpack.c.l.b16 %v74
    %v321 = vunpack.c.h.b16 %v74
    %v322 = vunpack.c.l.b16 %v75
    %v323 = vunpack.c.h.b16 %v75
    %v324 = vunpack.c.l.b16 %v76
    %v325 = vunpack.c.h.b16 %v76
    %v326 = vunpack.c.l.b16 %v77
    %v327 = vunpack.c.h.b16 %v77
    %v328 = vunpack.c.l.b16 %v78
    %v329 = vunpack.c.h.b16 %v78
    %v330 = vunpack.c.l.b16 %v79
    %v331 = vunpack.c.h.b16 %v79
    %v332 = vunpack.c.l.b16 %v80
    %v333 = vunpack.c.h.b16 %v80
    %v334 = vunpack.c.l.b16 %v81
    %v335 = vunpack.c.h.b16 %v81
    %v336 = vunpack.c.l.b16 %v82
    %v337 = vunpack.c.h.b16 %v82
    %v338 = vunpack.c.l.b16 %v83
    %v339 = vunpack.c.h.b16 %v83
    %v340 = vunpack.c.l.b16 %v84
    %v341 = vunpack.c.h.b16 %v84
    %v342 = vunpack.c.l.b16 %v85
    %v343 = vunpack.c.h.b16 %v85
    %v344 = vunpack.c.l.b16 %v86
    %v345 = vunpack.c.h.b16 %v86
    %v346 = vunpack.c.l.b16 %v87
    %v347 = vunpack.c.h.b16 %v87
    %v348 = vunpack.c.l.b16 %v88
    %v349 = vunpack.c.h.b16 %v88
    %v350 = vunpack.c.l.b16 %v89
    %v351 = vunpack.c.h.b16 %v89
    %v352 = vunpack.c.l.b16 %v90
    %v353 = vunpack.c.h.b16 %v90
    %v354 = vunpack.c.l.b16 %v91
    %v355 = vunpack.c.h.b16 %v91
    %v356 = vunpack.c.l.b16 %v92
    %v357 = vunpack.c.h.b16 %v92
    %v358 = vunpack.c.l.b16 %v93
    %v359 = vunpack.c.h.b16 %v93
    %v360 = vunpack.c.l.b16 %v94
    %v361 = vunpack.c.h.b16 %v94
    %v362 = vunpack.c.l.b16 %v95
    %v363 = vunpack.c.h.b16 %v95
    %v364 = vunpack.c.l.b16 %v96
    %v365 = vunpack.c.h.b16 %v96
    %v366 = vunpack.c.l.b16 %v97
    %v367 = vunpack.c.h.b16 %v97
    %v368 = vunpack.c.l.b16 %v98
    %v369 = vunpack.c.h.b16 %v98
    %v370 = vunpack.c.l.b16 %v99
    %v371 = vunpack.c.h.b16 %v99
    %v372 = vunpack.c.l.b16 %v100
    %v373 = vunpack.c.h.b16 %v100
    %v374 = vunpack.c.l.b16 %v101
    %v375 = vunpack.c.h.b16 %v101
    %v376 = vunpack.c.l.b16 %v102
    %v377 = vunpack.c.h.b16 %v102
    %v378 = vunpack.c.l.b16 %v103
    %v379 = vunpack.c.h.b16 %v103
    %v380 = vunpack.c.l.b16 %v104
    %v381 = vunpack.c.h.b16 %v104
    %v382 = vunpack.c.l.b16 %v105
    %v383 = vunpack.c.h.b16 %v105
    %v384 = vunpack.c.l.b16 %v106
    %v385 = vunpack.c.h.b16 %v106
    %v386 = vunpack.c.l.b16 %v107
    %v387 = vunpack.c.h.b16 %v107
    %v388 = vunpack.c.l.b16 %v108
    %v389 = vunpack.c.h.b16 %v108
    %v390 = vunpack.c.l.b16 %v109
    %v391 = vunpack.c.h.b16 %v109
    %v392 = vunpack.c.l.b16 %v110
    %v393 = vunpack.c.h.b16 %v110
    %v394 = vunpack.c.l.b16 %v111
    %v395 = vunpack.c.h.b16 %v111
    %v396 = vunpack.c.l.b16 %v112
    %v397 = vunpack.c.h.b16 %v112
    %v398 = vunpack.c.l.b16 %v113
    %v399 = vunpack.c.h.b16 %v113
    %v400 = vunpack.c.l.b16 %v114
    %v401 = vunpack.c.h.b16 %v114
    %v402 = vunpack.c.l.b16 %v115
    %v403 = vunpack.c.h.b16 %v115
    %v404 = vunpack.c.l.b16 %v116
    %v405 = vunpack.c.h.b16 %v116
    %v406 = vunpack.c.l.b16 %v117
    %v407 = vunpack.c.h.b16 %v117
    %v408 = vunpack.c.l.b16 %v118
    %v409 = vunpack.c.h.b16 %v118
    %v410 = vunpack.c.l.b16 %v119
    %v411 = vunpack.c.h.b16 %v119
    %v412 = vunpack.c.l.b16 %v120
    %v413 = vunpack.c.h.b16 %v120
    %v414 = vunpack.c.l.b16 %v121
    %v415 = vunpack.c.h.b16 %v121
    %v416 = vunpack.c.l.b16 %v122
    %v417 = vunpack.c.h.b16 %v122
    %v418 = vunpack.c.l.b16 %v123
    %v419 = vunpack.c.h.b16 %v123
    %v420 = vunpack.c.l.b16 %v124
    %v421 = vunpack.c.h.b16 %v124
    %v422 = vunpack.c.l.b16 %v125
    %v423 = vunpack.c.h.b16 %v125
    %v424 = vunpack.c.l.b16 %v126
    %v425 = vunpack.c.h.b16 %v126
    %v426 = vunpack.c.l.b16 %v127
    %v427 = vunpack.c.h.b16 %v127
    %v428 = vunpack.c.l.b16 %v128
    %v429 = vunpack.c.h.b16 %v128
    %v430 = vunpack.c.l.b16 %v129
    %v431 = vunpack.c.h.b16 %v129
    %v432 = vunpack.c.l.b16 %v130
    %v433 = vunpack.c.h.b16 %v130
    %v434 = vunpack.c.l.b16 %v131
    %v435 = vunpack.c.h.b16 %v131
    %v436 = vunpack.c.l.b16 %v132
    %v437 = vunpack.c.h.b16 %v132
    %v438 = vunpack.c.l.b16 %v133
    %v439 = vunpack.c.h.b16 %v133
    %v440 = vunpack.c.l.b16 %v134
    %v441 = vunpack.c.h.b16 %v134
    %v442 = vunpack.c.l.b16 %v135
    %v443 = vunpack.c.h.b16 %v135
    %v444 = vunpack.c.l.b16 %v136
    %v445 = vunpack.c.h.b16 %v136
    %v446 = vunpack.c.l.b16 %v137
    %v447 = vunpack.c.h.b16 %v137
    %v448 = vunpack.c.l.b16 %v138
    %v449 = vunpack.c.h.b16 %v138
    %v450 = vunpack.c.l.b16 %v139
    %v451 = vunpack.c.h.b16 %v139
    %v452 = vunpack.c.l.b16 %v140
    %v453 = vunpack.c.h.b16 %v140
    %v454 = vunpack.c.l.b16 %v141
    %v455 = vunpack.c.h.b16 %v141
    %v456 = vunpack.c.l.b16 %v142
    %v457 = vunpack.c.h.b16 %v142
    %v458 = vunpack.c.l.b16 %v143
    %v459 = vunpack.c.h.b16 %v143
    %v460 = vunpack.c.l.b16 %v144
    %v461 = vunpack.c.h.b16 %v144
    %v462 = vunpack.c.l.b16 %v145
    %v463 = vunpack.c.h.b16 %v145
    %v464 = vunpack.c.l.b16 %v146
    %v465 = vunpack.c.h.b16 %v146
    %v466 = vunpack.c.l.b16 %v147
    %v467 = vunpack.c.h.b16 %v147
    %v468 = vunpack.c.l.b16 %v148
    %v469 = vunpack.c.h.b16 %v148
    %v470 = vunpack.c.l.b16 %v149
    %v471 = vunpack.c.h.b16 %v149
    %v472 = vunpack.c.l.b16 %v150
    %v473 = vunpack.c.h.b16 %v150
    %v474 = vunpack.c.l.b16 %v151
    %v475 = vunpack.c.h.b16 %v151
    %v476 = vunpack.c.l.b16 %v152
    %v477 = vunpack.c.h.b16 %v152
    %v478 = vunpack.c.l.b16 %v153
    %v479 = vunpack.c.h.b16 %v153
    %v480 = vunpack.c.l.b16 %v154
    %v481 = vunpack.c.h.b16 %v154
    %v482 = vunpack.c.l.b16 %v155
    %v483 = vunpack.c.h.b16 %v155
    %v484 = vunpack.c.l.b16 %v156
    %v485 = vunpack.c.h.b16 %v156
    %v486 = vunpack.c.l.b16 %v157
    %v487 = vunpack.c.h.b16 %v157
    %v488 = vunpack.c.l.b16 %v158
    %v489 = vunpack.c.h.b16 %v158
    %v490 = vunpack.c.l.b16 %v159
    %v491 = vunpack.c.h.b16 %v159
    %v492 = vunpack.c.l.b16 %v160
    %v493 = vunpack.c.h.b16 %v160
    %v494 = vunpack.c.l.b16 %v161
    %v495 = vunpack.c.h.b16 %v161
    %v496 = vunpack.c.l.b16 %v162
    %v497 = vunpack.c.h.b16 %v162
    %v498 = vunpack.c.l.b16 %v163
    %v499 = vunpack.c.h.b16 %v163
    %v500 = vunpack.c.l.b16 %v164
    %v501 = vunpack.c.h.b16 %v164
    %v502 = vunpack.c.l.b16 %v165
    %v503 = vunpack.c.h.b16 %v165
    %v504 = vunpack.c.l.b16 %v166
    %v505 = vunpack.c.h.b16 %v166
    %v506 = vunpack.c.l.b16 %v167
    %v507 = vunpack.c.h.b16 %v167
    %v508 = vunpack.c.l.b16 %v168
    %v509 = vunpack.c.h.b16 %v168
    %v510 = vunpack.c.l.b16 %v169
    %v511 = vunpack.c.h.b16 %v169
    %v512 = vpack.c.b16 %v290, %v288
    %v513 = vpack.c.b16 %v291, %v289
    %v514 = vpack.c.b16 %v294, %v292
    %v515 = vpack.c.b16 %v295, %v293
    %v516 = vpack.c.b16 %v298, %v296
    %v517 = vpack.c.b16 %v299, %v297
    %v518 = vpack.c.b16 %v302, %v300
    %v519 = vpack.c.b16 %v303, %v301
    %v520 = vpack.c.b16 %v306, %v304
    %v521 = vpack.c.b16 %v307, %v305
    %v522 = vpack.c.b16 %v310, %v308
    %v523 = vpack.c.b16 %v311, %v309
    %v524 = vpack.c.b16 %v314, %v312
    %v525 = vpack.c.b16 %v315, %v313
    %v526 = vpack.c.b16 %v318, %v316
    %v527 = vpack.c.b16 %v319, %v317
    %v528 = vpack.c.b16 %v322, %v320
    %v529 = vpack.c.b16 %v323, %v321
    %v530 = vpack.c.b16 %v326, %v324
    %v531 = vpack.c.b16 %v327, %v325
    %v532 = vpack.c.b16 %v330, %v328
    %v533 = vpack.c.b16 %v331, %v329
    %v534 = vpack.c.b16 %v334, %v332
    %v535 = vpack.c.b16 %v335, %v333
    %v536 = vpack.c.b16 %v338, %v336
    %v537 = vpack.c.b16 %v339, %v337
    %v538 = vpack.c.b16 %v342, %v340
    %v539 = vpack.c.b16 %v343, %v341
    %v540 = vpack.c.b16 %v346, %v344
    %v541 = vpack.c.b16 %v347, %v345
    %v542 = vpack.c.b16 %v350, %v348
    %v543 = vpack.c.b16 %v351, %v349
    %v544 = vpack.c.b16 %v354, %v352
    %v545 = vpack.c.b16 %v355, %v353
    %v546 = vpack.c.b16 %v358, %v356
    %v547 = vpack.c.b16 %v359, %v357
    %v548 = vpack.c.b16 %v362, %v360
    %v549 = vpack.c.b16 %v363, %v361
    %v550 = vpack.c.b16 %v366, %v364
    %v551 = vpack.c.b16 %v367, %v365
    %v552 = vpack.c.b16 %v370, %v368
    %v553 = vpack.c.b16 %v371, %v369
    %v554 = vpack.c.b16 %v374, %v372
    %v555 = vpack.c.b16 %v375, %v373
    %v556 = vpack.c.b16 %v378, %v376
    %v557 = vpack.c.b16 %v379, %v377
    %v558 = vpack.c.b16 %v382, %v380
    %v559 = vpack.c.b16 %v383, %v381
    %v560 = vpack.c.b16 %v386, %v384
    %v561 = vpack.c.b16 %v387, %v385
    %v562 = vpack.c.b16 %v390, %v388
    %v563 = vpack.c.b16 %v391, %v389
    %v564 = vpack.c.b16 %v394, %v392
    %v565 = vpack.c.b16 %v395, %v393
    %v566 = vpack.c.b16 %v398, %v396
    %v567 = vpack.c.b16 %v399, %v397
    %v568 = vpack.c.b16 %v402, %v400
    %v569 = vpack.c.b16 %v403, %v401
    %v570 = vpack.c.b16 %v406, %v404
    %v571 = vpack.c.b16 %v407, %v405
    %v572 = vpack.c.b16 %v410, %v408
    %v573 = vpack.c.b16 %v411, %v409
    %v574 = vpack.c.b16 %v414, %v412
    %v575 = vpack.c.b16 %v415, %v413
    %v576 = vpack.c.b16 %v418, %v416
    %v577 = vpack.c.b16 %v419, %v417
    %v578 = vpack.c.b16 %v422, %v420
    %v579 = vpack.c.b16 %v423, %v421
    %v580 = vpack.c.b16 %v426, %v424
    %v581 = vpack.c.b16 %v427, %v425
    %v582 = vpack.c.b16 %v430, %v428
    %v583 = vpack.c.b16 %v431, %v429
    %v584 = vpack.c.b16 %v434, %v432
    %v585 = vpack.c.b16 %v435, %v433
    %v586 = vpack.c.b16 %v438, %v436
    %v587 = vpack.c.b16 %v439, %v437
    %v588 = vpack.c.b16 %v442, %v440
    %v589 = vpack.c.b16 %v443, %v441
    %v590 = vpack.c.b16 %v446, %v444
    %v591 = vpack.c.b16 %v447, %v445
    %v592 = vpack.c.b16 %v450, %v448
    %v593 = vpack.c.b16 %v451, %v449
    %v594 = vpack.c.b16 %v454, %v452
    %v595 = vpack.c.b16 %v455, %v453
    %v596 = vpack.c.b16 %v458, %v456
    %v597 = vpack.c.b16 %v459, %v457
    %v598 = vpack.c.b16 %v462, %v460
    %v599 = vpack.c.b16 %v463, %v461
    %v600 = vpack.c.b16 %v466, %v464
    %v601 = vpack.c.b16 %v467, %v465
    %v602 = vpack.c.b16 %v470, %v468
    %v603 = vpack.c.b16 %v471, %v469
    %v604 = vpack.c.b16 %v474, %v472
    %v605 = vpack.c.b16 %v475, %v473
    %v606 = vpack.c.b16 %v478, %v476
    %v607 = vpack.c.b16 %v479, %v477
    %v608 = vpack.c.b16 %v482, %v480
    %v609 = vpack.c.b16 %v483, %v481
    %v610 = vpack.c.b16 %v486, %v484
    %v611 = vpack.c.b16 %v487, %v485
    %v612 = vpack.c.b16 %v490, %v488
    %v613 = vpack.c.b16 %v491, %v489
    %v614 = vpack.c.b16 %v494, %v492
    %v615 = vpack.c.b16 %v495, %v493
    %v616 = vpack.c.b16 %v498, %v496
    %v617 = vpack.c.b16 %v499, %v497
    %v618 = vpack.c.b16 %v502, %v500
    %v619 = vpack.c.b16 %v503, %v501
    %v620 = vpack.c.b16 %v506, %v504
    %v621 = vpack.c.b16 %v507, %v505
    %v622 = vpack.c.b16 %v510, %v508
    %v623 = vpack.c.b16 %v511, %v509
    %736 = vmatpush.bf16.msra.mxu0 %v526
    %737 = vmatpush.bf16.msra.mxu0 %v524
    %738 = vmatpush.bf16.msra.mxu0 %v522
    %739 = vmatpush.bf16.msra.mxu0 %v520
    %740 = vmatpush.bf16.msra.mxu0 %v518
    %741 = vmatpush.bf16.msra.mxu0 %v516
    %742 = vmatpush.bf16.msra.mxu0 %v514
    %743 = vmatpush.bf16.msra.mxu0 %v512
    %744 = vmatmul.bf16.gmra.mxu0 %v51
    %v745 = vpop.f32.mrf.mxu0
    %v746 = vadd.f32 %v172, %v745
    %v747 = vpop.f32.mrf.mxu0
    %748 = vdwg.mxu0
    %749 = vmatpush.bf16.msra.mxu0 %v542
    %750 = vmatpush.bf16.msra.mxu0 %v540
    %751 = vmatpush.bf16.msra.mxu0 %v538
    %752 = vmatpush.bf16.msra.mxu0 %v536
    %753 = vmatpush.bf16.msra.mxu0 %v534
    %754 = vmatpush.bf16.msra.mxu0 %v532
    %755 = vmatpush.bf16.msra.mxu0 %v530
    %756 = vmatpush.bf16.msra.mxu0 %v528
    %757 = vmatmul.bf16.gmra.mxu0 %v52
    %v758 = vpop.f32.mrf.mxu0
    %v759 = vadd.f32 %v746, %v758
    %v760 = vpop.f32.mrf.mxu0
    %761 = vdwg.mxu0
    %762 = vmatpush.bf16.msra.mxu0 %v558
    %763 = vmatpush.bf16.msra.mxu0 %v556
    %764 = vmatpush.bf16.msra.mxu0 %v554
    %765 = vmatpush.bf16.msra.mxu0 %v552
    %766 = vmatpush.bf16.msra.mxu0 %v550
    %767 = vmatpush.bf16.msra.mxu0 %v548
    %768 = vmatpush.bf16.msra.mxu0 %v546
    %769 = vmatpush.bf16.msra.mxu0 %v544
    %770 = vmatmul.bf16.gmra.mxu0 %v53
    %v771 = vpop.f32.mrf.mxu0
    %v772 = vadd.f32 %v759, %v771
    %v773 = vpop.f32.mrf.mxu0
    %774 = vdwg.mxu0
    %775 = vmatpush.bf16.msra.mxu0 %v574
    %776 = vmatpush.bf16.msra.mxu0 %v572
    %777 = vmatpush.bf16.msra.mxu0 %v570
    %778 = vmatpush.bf16.msra.mxu0 %v568
    %779 = vmatpush.bf16.msra.mxu0 %v566
    %780 = vmatpush.bf16.msra.mxu0 %v564
    %781 = vmatpush.bf16.msra.mxu0 %v562
    %782 = vmatpush.bf16.msra.mxu0 %v560
    %783 = vmatmul.bf16.gmra.mxu0 %v54
    %v784 = vpop.f32.mrf.mxu0
    %v785 = vadd.f32 %v772, %v784
    %v786 = vpop.f32.mrf.mxu0
    %787 = vdwg.mxu0
    %788 = vmatpush.bf16.msra.mxu0 %v590
    %789 = vmatpush.bf16.msra.mxu0 %v588
    %790 = vmatpush.bf16.msra.mxu0 %v586
    %791 = vmatpush.bf16.msra.mxu0 %v584
    %792 = vmatpush.bf16.msra.mxu0 %v582
    %793 = vmatpush.bf16.msra.mxu0 %v580
    %794 = vmatpush.bf16.msra.mxu0 %v578
    %795 = vmatpush.bf16.msra.mxu0 %v576
    %796 = vmatmul.bf16.gmra.mxu0 %v55
    %v797 = vpop.f32.mrf.mxu0
    %v798 = vadd.f32 %v785, %v797
    %v799 = vpop.f32.mrf.mxu0
    %800 = vdwg.mxu0
    %801 = vmatpush.bf16.msra.mxu0 %v606
    %802 = vmatpush.bf16.msra.mxu0 %v604
    %803 = vmatpush.bf16.msra.mxu0 %v602
    %804 = vmatpush.bf16.msra.mxu0 %v600
    %805 = vmatpush.bf16.msra.mxu0 %v598
    %806 = vmatpush.bf16.msra.mxu0 %v596
    %807 = vmatpush.bf16.msra.mxu0 %v594
    %808 = vmatpush.bf16.msra.mxu0 %v592
    %809 = vmatmul.bf16.gmra.mxu0 %v56
    %v810 = vpop.f32.mrf.mxu0
    %v811 = vadd.f32 %v798, %v810
    %v812 = vpop.f32.mrf.mxu0
    %813 = vdwg.mxu0
    %814 = vmatpush.bf16.msra.mxu0 %v622
    %815 = vmatpush.bf16.msra.mxu0 %v620
    %816 = vmatpush.bf16.msra.mxu0 %v618
    %817 = vmatpush.bf16.msra.mxu0 %v616
    %818 = vmatpush.bf16.msra.mxu0 %v614
    %819 = vmatpush.bf16.msra.mxu0 %v612
    %820 = vmatpush.bf16.msra.mxu0 %v610
    %821 = vmatpush.bf16.msra.mxu0 %v608
    %822 = vmatmul.bf16.gmra.mxu0 %v57
    %v823 = vpop.f32.mrf.mxu0
    %v824 = vadd.f32 %v811, %v823
    %v825 = vpop.f32.mrf.mxu0
    %826 = vdwg.mxu0
    %827 = vmatpush.bf16.msra.mxu0 %v527
    %828 = vmatpush.bf16.msra.mxu0 %v525
    %829 = vmatpush.bf16.msra.mxu0 %v523
    %830 = vmatpush.bf16.msra.mxu0 %v521
    %831 = vmatpush.bf16.msra.mxu0 %v519
    %832 = vmatpush.bf16.msra.mxu0 %v517
    %833 = vmatpush.bf16.msra.mxu0 %v515
    %834 = vmatpush.bf16.msra.mxu0 %v513
    %835 = vmatmul.bf16.gmra.mxu0 %v51
    %v836 = vpop.f32.mrf.mxu0
    %v837 = vadd.f32 %v173, %v836
    %v838 = vpop.f32.mrf.mxu0
    %839 = vdwg.mxu0
    %840 = vmatpush.bf16.msra.mxu0 %v543
    %841 = vmatpush.bf16.msra.mxu0 %v541
    %842 = vmatpush.bf16.msra.mxu0 %v539
    %843 = vmatpush.bf16.msra.mxu0 %v537
    %844 = vmatpush.bf16.msra.mxu0 %v535
    %845 = vmatpush.bf16.msra.mxu0 %v533
    %846 = vmatpush.bf16.msra.mxu0 %v531
    %847 = vmatpush.bf16.msra.mxu0 %v529
    %848 = vmatmul.bf16.gmra.mxu0 %v52
    %v849 = vpop.f32.mrf.mxu0
    %v850 = vadd.f32 %v837, %v849
    %v851 = vpop.f32.mrf.mxu0
    %852 = vdwg.mxu0
    %853 = vmatpush.bf16.msra.mxu0 %v559
    %854 = vmatpush.bf16.msra.mxu0 %v557
    %855 = vmatpush.bf16.msra.mxu0 %v555
    %856 = vmatpush.bf16.msra.mxu0 %v553
    %857 = vmatpush.bf16.msra.mxu0 %v551
    %858 = vmatpush.bf16.msra.mxu0 %v549
    %859 = vmatpush.bf16.msra.mxu0 %v547
    %860 = vmatpush.bf16.msra.mxu0 %v545
    %861 = vmatmul.bf16.gmra.mxu0 %v53
    %v862 = vpop.f32.mrf.mxu0
    %v863 = vadd.f32 %v850, %v862
    %v864 = vpop.f32.mrf.mxu0
    %865 = vdwg.mxu0
    %866 = vmatpush.bf16.msra.mxu0 %v575
    %867 = vmatpush.bf16.msra.mxu0 %v573
    %868 = vmatpush.bf16.msra.mxu0 %v571
    %869 = vmatpush.bf16.msra.mxu0 %v569
    %870 = vmatpush.bf16.msra.mxu0 %v567
    %871 = vmatpush.bf16.msra.mxu0 %v565
    %872 = vmatpush.bf16.msra.mxu0 %v563
    %873 = vmatpush.bf16.msra.mxu0 %v561
    %874 = vmatmul.bf16.gmra.mxu0 %v54
    %v875 = vpop.f32.mrf.mxu0
    %v876 = vadd.f32 %v863, %v875
    %v877 = vpop.f32.mrf.mxu0
    %878 = vdwg.mxu0
    %879 = vmatpush.bf16.msra.mxu0 %v591
    %880 = vmatpush.bf16.msra.mxu0 %v589
    %881 = vmatpush.bf16.msra.mxu0 %v587
    %882 = vmatpush.bf16.msra.mxu0 %v585
    %883 = vmatpush.bf16.msra.mxu0 %v583
    %884 = vmatpush.bf16.msra.mxu0 %v581
    %885 = vmatpush.bf16.msra.mxu0 %v579
    %886 = vmatpush.bf16.msra.mxu0 %v577
    %887 = vmatmul.bf16.gmra.mxu0 %v55
    %v888 = vpop.f32.mrf.mxu0
    %v889 = vadd.f32 %v876, %v888
    %v890 = vpop.f32.mrf.mxu0
    %891 = vdwg.mxu0
    %892 = vmatpush.bf16.msra.mxu0 %v607
    %893 = vmatpush.bf16.msra.mxu0 %v605
    %894 = vmatpush.bf16.msra.mxu0 %v603
    %895 = vmatpush.bf16.msra.mxu0 %v601
    %896 = vmatpush.bf16.msra.mxu0 %v599
    %897 = vmatpush.bf16.msra.mxu0 %v597
    %898 = vmatpush.bf16.msra.mxu0 %v595
    %899 = vmatpush.bf16.msra.mxu0 %v593
    %900 = vmatmul.bf16.gmra.mxu0 %v56
    %v901 = vpop.f32.mrf.mxu0
    %v902 = vadd.f32 %v889, %v901
    %v903 = vpop.f32.mrf.mxu0
    %904 = vdwg.mxu0
    %905 = vmatpush.bf16.msra.mxu0 %v623
    %906 = vmatpush.bf16.msra.mxu0 %v621
    %907 = vmatpush.bf16.msra.mxu0 %v619
    %908 = vmatpush.bf16.msra.mxu0 %v617
    %909 = vmatpush.bf16.msra.mxu0 %v615
    %910 = vmatpush.bf16.msra.mxu0 %v613
    %911 = vmatpush.bf16.msra.mxu0 %v611
    %912 = vmatpush.bf16.msra.mxu0 %v609
    %913 = vmatmul.bf16.gmra.mxu0 %v57
    %v914 = vpop.f32.mrf.mxu0
    %v915 = vadd.f32 %v902, %v914
    %v916 = vpop.f32.mrf.mxu0
    %917 = vdwg.mxu0
    %v918 = vmax.f32 %v824, 0.0
    %v919 = vmax.f32 %v915, 0.0
    %v920 = vpack.c.bf16 %v918, %v918
    %v921 = vpack.c.bf16 %v919, %v919
    %v922 = vld [vmem:[%s3] sm:$0xf]
    %v923 = vld [vmem:[%s3 + $0x4] sm:$0xf]
    %v924 = vld [vmem:[%s3 + $0x8] sm:$0xf]
    %v925 = vld [vmem:[%s3 + $0xc] sm:$0xf]
    %v926 = vld [vmem:[%s3 + $0x10] sm:$0xf]
    %v927 = vld [vmem:[%s3 + $0x14] sm:$0xf]
    %v928 = vld [vmem:[%s3 + $0x18] sm:$0xf]
    %v929 = vld [vmem:[%s3 + $0x1c] sm:$0xf]
    %v930 = vld [vmem:[%s3 + $0x20] sm:$0xf]
    %v931 = vld [vmem:[%s3 + $0x24] sm:$0xf]
    %v932 = vld [vmem:[%s3 + $0x28] sm:$0xf]
    %v933 = vld [vmem:[%s3 + $0x2c] sm:$0xf]
    %v934 = vld [vmem:[%s3 + $0x30] sm:$0xf]
    %v935 = vld [vmem:[%s3 + $0x34] sm:$0xf]
    %v936 = vld [vmem:[%s3 + $0x38] sm:$0xf]
    %v937 = vld [vmem:[%s3 + $0x3c] sm:$0xf]
    %v938 = vld [vmem:[%s3 + $0x40] sm:$0xf]
    %v939 = vld [vmem:[%s3 + $0x44] sm:$0xf]
    %v940 = vld [vmem:[%s3 + $0x48] sm:$0xf]
    %v941 = vld [vmem:[%s3 + $0x4c] sm:$0xf]
    %v942 = vld [vmem:[%s3 + $0x50] sm:$0xf]
    %v943 = vld [vmem:[%s3 + $0x54] sm:$0xf]
    %v944 = vld [vmem:[%s3 + $0x58] sm:$0xf]
    %v945 = vld [vmem:[%s3 + $0x5c] sm:$0xf]
    %v946 = vld [vmem:[%s3 + $0x60] sm:$0xf]
    %v947 = vld [vmem:[%s3 + $0x64] sm:$0xf]
    %v948 = vld [vmem:[%s3 + $0x68] sm:$0xf]
    %v949 = vld [vmem:[%s3 + $0x6c] sm:$0xf]
    %v950 = vld [vmem:[%s3 + $0x70] sm:$0xf]
    %v951 = vld [vmem:[%s3 + $0x74] sm:$0xf]
    %v952 = vld [vmem:[%s3 + $0x78] sm:$0xf]
    %v953 = vld [vmem:[%s3 + $0x7c] sm:$0xf]
    %v954 = vld [vmem:[%s4] sm:$0x1]
    %v956 = vperm.slane %v954, 0
    %v990 = vunpack.c.l.b16 %v922
    %v991 = vunpack.c.l.b16 %v923
    %v992 = vunpack.c.l.b16 %v924
    %v993 = vunpack.c.l.b16 %v925
    %v994 = vunpack.c.l.b16 %v926
    %v995 = vunpack.c.l.b16 %v927
    %v996 = vunpack.c.l.b16 %v928
    %v997 = vunpack.c.l.b16 %v929
    %v998 = vunpack.c.l.b16 %v930
    %v999 = vunpack.c.l.b16 %v931
    %v1000 = vunpack.c.l.b16 %v932
    %v1001 = vunpack.c.l.b16 %v933
    %v1002 = vunpack.c.l.b16 %v934
    %v1003 = vunpack.c.l.b16 %v935
    %v1004 = vunpack.c.l.b16 %v936
    %v1005 = vunpack.c.l.b16 %v937
    %v1006 = vunpack.c.l.b16 %v938
    %v1007 = vunpack.c.l.b16 %v939
    %v1008 = vunpack.c.l.b16 %v940
    %v1009 = vunpack.c.l.b16 %v941
    %v1010 = vunpack.c.l.b16 %v942
    %v1011 = vunpack.c.l.b16 %v943
    %v1012 = vunpack.c.l.b16 %v944
    %v1013 = vunpack.c.l.b16 %v945
    %v1014 = vunpack.c.l.b16 %v946
    %v1015 = vunpack.c.l.b16 %v947
    %v1016 = vunpack.c.l.b16 %v948
    %v1017 = vunpack.c.l.b16 %v949
    %v1018 = vunpack.c.l.b16 %v950
    %v1019 = vunpack.c.l.b16 %v951
    %v1020 = vunpack.c.l.b16 %v952
    %v1021 = vunpack.c.l.b16 %v953
    %v1022 = vpack.c.b16 %v991, %v990
    %v1023 = vpack.c.b16 %v993, %v992
    %v1024 = vpack.c.b16 %v995, %v994
    %v1025 = vpack.c.b16 %v997, %v996
    %v1026 = vpack.c.b16 %v999, %v998
    %v1027 = vpack.c.b16 %v1001, %v1000
    %v1028 = vpack.c.b16 %v1003, %v1002
    %v1029 = vpack.c.b16 %v1005, %v1004
    %v1030 = vpack.c.b16 %v1007, %v1006
    %v1031 = vpack.c.b16 %v1009, %v1008
    %v1032 = vpack.c.b16 %v1011, %v1010
    %v1033 = vpack.c.b16 %v1013, %v1012
    %v1034 = vpack.c.b16 %v1015, %v1014
    %v1035 = vpack.c.b16 %v1017, %v1016
    %v1036 = vpack.c.b16 %v1019, %v1018
    %v1037 = vpack.c.b16 %v1021, %v1020
    %1054 = vmatpush.bf16.msra.mxu0 %v1029
    %1055 = vmatpush.bf16.msra.mxu0 %v1028
    %1056 = vmatpush.bf16.msra.mxu0 %v1027
    %1057 = vmatpush.bf16.msra.mxu0 %v1026
    %1058 = vmatpush.bf16.msra.mxu0 %v1025
    %1059 = vmatpush.bf16.msra.mxu0 %v1024
    %1060 = vmatpush.bf16.msra.mxu0 %v1023
    %1061 = vmatpush.bf16.msra.mxu0 %v1022
    %1062 = vmatmul.bf16.gmra.mxu0 %v920
    %v1063 = vpop.f32.mrf.mxu0
    %v1064 = vadd.f32 %v956, %v1063
    %v1065 = vpop.f32.mrf.mxu0
    %1066 = vdwg.mxu0
    %1067 = vmatpush.bf16.msra.mxu0 %v1037
    %1068 = vmatpush.bf16.msra.mxu0 %v1036
    %1069 = vmatpush.bf16.msra.mxu0 %v1035
    %1070 = vmatpush.bf16.msra.mxu0 %v1034
    %1071 = vmatpush.bf16.msra.mxu0 %v1033
    %1072 = vmatpush.bf16.msra.mxu0 %v1032
    %1073 = vmatpush.bf16.msra.mxu0 %v1031
    %1074 = vmatpush.bf16.msra.mxu0 %v1030
    %1075 = vmatmul.bf16.gmra.mxu0 %v921
    %v1076 = vpop.f32.mrf.mxu0
    %v1077 = vadd.f32 %v1064, %v1076
    %v1078 = vpop.f32.mrf.mxu0
    %1079 = vdwg.mxu0
    %v1080 = vmax.f32 %v1077, 0.0
    %v1081 = vpack.c.bf16 %v1080, %v1080
    %v1082 = vld [vmem:[%s5] sm:$0xf]
    %v1083 = vld [vmem:[%s5 + $0x4] sm:$0xf]
    %v1084 = vld [vmem:[%s5 + $0x8] sm:$0xf]
    %v1085 = vld [vmem:[%s5 + $0xc] sm:$0xf]
    %v1086 = vld [vmem:[%s5 + $0x10] sm:$0xf]
    %v1087 = vld [vmem:[%s5 + $0x14] sm:$0xf]
    %v1088 = vld [vmem:[%s5 + $0x18] sm:$0xf]
    %v1089 = vld [vmem:[%s5 + $0x1c] sm:$0xf]
    %v1090 = vld [vmem:[%s6] sm:$0x1]
    %v1092 = vperm.slane %v1090, 0
    %v1102 = vunpack.c.l.b16 %v1082
    %v1103 = vunpack.c.l.b16 %v1083
    %v1104 = vunpack.c.l.b16 %v1084
    %v1105 = vunpack.c.l.b16 %v1085
    %v1106 = vunpack.c.l.b16 %v1086
    %v1107 = vunpack.c.l.b16 %v1087
    %v1108 = vunpack.c.l.b16 %v1088
    %v1109 = vunpack.c.l.b16 %v1089
    %v1110 = vpack.c.b16 %v1103, %v1102
    %v1111 = vpack.c.b16 %v1105, %v1104
    %v1112 = vpack.c.b16 %v1107, %v1106
    %v1113 = vpack.c.b16 %v1109, %v1108
    %vm1118 = vcmask 523264
    %v1120 = vsel %vm1118, %v1081, 0
    %1122 = vmatpush.bf16.msra.mxu0 0
    %1123 = vmatpush.bf16.msra.mxu0 0
    %1124 = vmatpush.bf16.msra.mxu0 0
    %1125 = vmatpush.bf16.msra.mxu0 0
    %1126 = vmatpush.bf16.msra.mxu0 %v1113
    %1127 = vmatpush.bf16.msra.mxu0 %v1112
    %1128 = vmatpush.bf16.msra.mxu0 %v1111
    %1129 = vmatpush.bf16.msra.mxu0 %v1110
    %1130 = vmatmul.bf16.gmra.mxu0 %v1120
    %v1131 = vpop.f32.mrf.mxu0
    %v1132 = vadd.f32 %v1092, %v1131
    %v1133 = vpop.f32.mrf.mxu0
    %1134 = vdwg.mxu0
    %1135 = vst [vmem:[#allocation5] sm:$0xff] %v1132
    // Predicated region
    $region34: #{tpu_custom_call.1} parent=1 // pred_check
      _
    $region35: #{tpu_custom_call.1} parent=1 // pred_check_branch
      %1137 = sbr.rel (0) target = $region37
    $region36: #{tpu_custom_call.1} parent=1 // pred_region
      %1139 = vsyncadd [#allocation4], 0
      %s1141 = sshll.u32 [#allocation5], 4
      %s1142 = int_to_ptr.vmem [resolvable:$true] %s1141
      %s1143 = sshll.u32 %s7, 4
      %s1144 = int_to_ptr.hbm [resolvable:$true] %s1143
      %1146 = dma.vmem_to_hbm [thread:$0]  %s1142, 128, %s1144, [#allocation4]
    $region37: #{tpu_custom_call.1} parent=1 // pred_fallthru
      _
    // Predicated region
    $region38: #{tpu_custom_call.1} parent=1 // pred_check
      _
    $region39: #{tpu_custom_call.1} parent=1 // pred_check_branch
      %1148 = sbr.rel (0) target = $region41
    $region40: #{tpu_custom_call.1} parent=1 // pred_region
      %1150 = dma.done [#allocation4], 128
    $region41: #{tpu_custom_call.1} parent=1 // pred_fallthru
      _
    %1151 = vsyncpa [#allocation3], 1
    %1152 = vsyncpa [#allocation4], 1

</llo_original>
